<compile_context>
chip_gen: v5e
topology: v5e:2x2
jax: 0.10.0
libtpu: 0.0.40
codegen_flags: <defaults>
</compile_context>

<pallas_src>
import math

import jax
import jax.numpy as jnp
from jax.experimental import pallas as pl
from jax.experimental.pallas import tpu as pltpu

LN_EPS = 1e-5  # PyTorch nn.LayerNorm default


# --------------------------------------------------------------------------- #
# Kernel
# --------------------------------------------------------------------------- #
def _attn_kernel(qidx_ref, kidx_ref,                 # scalar-prefetch (SMEM)
                 q_ref, kv_ref, wq_ref, bq_ref, g_ref, b_ref, kvec_ref, vvec_ref,
                 o_ref,
                 q_sc, m_sc, l_sc, acc_sc):
    # q_ref / kv_ref: (bb, tq, D) bf16; o_ref: (bb, tq, D) f32
    # wq_ref: (D, D) bf16; bq/g/b: (1, D) f32; kvec/vvec: (1, D) bf16
    # scratch: q_sc (bb, tq, D) bf16; m_sc/l_sc (bb, tq, 1) f32; acc_sc (bb, tq, D) f32
    bb, tq, d = q_ref.shape
    tk = kv_ref.shape[1]
    t = pl.program_id(1)
    qblk = qidx_ref[t]          # cheap SMEM scalar reads
    kblk = kidx_ref[t]

    # ---- first k-step of every (batch-block, q-block): init state + query path ----
    @pl.when(kblk == 0)
    def _init():
        m_sc[...] = jnp.full_like(m_sc, -jnp.inf)
        l_sc[...] = jnp.zeros_like(l_sc)
        acc_sc[...] = jnp.zeros_like(acc_sc)
        # Fused q-linear over every row of the block: (bb*tq, d) @ (d, d), bf16 MXU,
        # f32 accumulation.  (D=32 fills only 32 MXU rows -> maximize M = bb*tq.)
        q2d = q_ref[...].reshape(bb * tq, d)
        q2d = jnp.dot(q2d, wq_ref[...], preferred_element_type=jnp.float32) + bq_ref[...]
        # LayerNorm in f32.
        mean = jnp.mean(q2d, axis=-1, keepdims=True)
        cent = q2d - mean
        var = jnp.mean(cent * cent, axis=-1, keepdims=True)
        q2d = cent * jax.lax.rsqrt(var + LN_EPS)
        # Affine with sigmoid(query_vector) gate and 1/sqrt(d) folded in (wrapper).
        q2d = q2d * g_ref[...] + b_ref[...]
        q_sc[...] = q2d.reshape(bb, tq, d).astype(jnp.bfloat16)

    # ---- every triangular step attends (k <= q by construction of the grid) ----
    kv = kv_ref[...]                          # bf16; loaded once, gated twice
    key_bf = kv * kvec_ref[...]               # bf16
    val_bf = kv * vvec_ref[...]               # bf16
    s = jnp.einsum("bqd,bkd->bqk", q_sc[...], key_bf,
                   preferred_element_type=jnp.float32)      # bf16 in, f32 acc

    def online_update(scores):
        m_prev, l_prev, a_prev = m_sc[...], l_sc[...], acc_sc[...]
        m_new = jnp.maximum(m_prev, jnp.max(scores, axis=-1, keepdims=True))
        alpha = jnp.exp(m_prev - m_new)                      # tiny (bb,tq,1), keep f32
        # Heavy exp stream in bf16 (feeds the bf16 PV matmul directly); sum in f32.
        p = jnp.exp((scores - m_new).astype(jnp.bfloat16))
        l_new = alpha * l_prev + jnp.sum(p, axis=-1, keepdims=True, dtype=jnp.float32)
        a_new = alpha * a_prev + jnp.einsum("bqk,bkd->bqd", p, val_bf,
                                            preferred_element_type=jnp.float32)
        return m_new, l_new, a_new

    @pl.when(kblk < qblk)           # fully visible tile: no mask needed
    def _full():
        m_new, l_new, a_new = online_update(s)
        m_sc[...] = m_new
        l_sc[...] = l_new
        acc_sc[...] = a_new

    @pl.when(kblk == qblk)          # diagonal tile: causal mask + finalize (last k step)
    def _diag():
        row = jax.lax.broadcasted_iota(jnp.int32, (tq, tk), 0)
        col = jax.lax.broadcasted_iota(jnp.int32, (tq, tk), 1)
        sm = jnp.where((col <= row)[None, :, :], s, -jnp.inf)
        _, l_new, a_new = online_update(sm)
        o_ref[...] = (a_new * pl.reciprocal(l_new, approx=True)).astype(o_ref.dtype)


# --------------------------------------------------------------------------- #
# Tiling heuristics
# --------------------------------------------------------------------------- #
def _chip_params():
    """Per-generation budgets. v7x: 64 MiB VMEM / 2 TCs; v5e/v6e: 128 MiB / 1 TC."""
    kind = ""
    try:
        kind = jax.devices()[0].device_kind.lower()
    except Exception:
        pass
    if ("v7" in kind) or (not kind):
        # v7x (or unknown -> be conservative): small VMEM, two TensorCores.
        return {"bb_budget": 24 << 20, "vmem_limit": 52 << 20, "two_cores": True}
    # v5e / v6e: 128 MiB physical VMEM, single TensorCore.
    return {"bb_budget": 64 << 20, "vmem_limit": 100 << 20, "two_cores": False}


def _choose_tq(T):
    """Return (tile_len, padded_T). Single full tile when small, else 256/128-aligned."""
    if T <= 256:
        return T, T                       # block == full dim -> no alignment constraint
    for cand in (256, 128):               # 256 fills the v6e/v7x MXU N dimension
        if T % cand == 0:
            return cand, T
    T_pad = ((T + 127) // 128) * 128      # pad instead of a single huge tile
    return 128, T_pad


def _vmem_per_batch_row(tq, d):
    io = 2 * (tq * d * 2) * 2 + 2 * (tq * d * 4)         # q/kv bf16 + out f32, double-buffered
    scratch = tq * d * 2 + 2 * (tq * 4) + tq * d * 4     # q_sc bf16, m/l f32, acc f32
    work = tq * tq * 4 + tq * tq * 2 + 2 * (tq * d * 2)  # f32 scores, bf16 probs, gated kv
    return io + scratch + work


def _choose_bb(B, tq, d, budget_bytes, two_cores):
    per_b = _vmem_per_batch_row(tq, d)
    bb = max(1, min(B, budget_bytes // max(per_b, 1)))
    if two_cores and B >= 2:
        bb = min(bb, (B + 1) // 2)        # keep >= 2 batch grid steps (v7x: 2 TCs,
    return int(bb)                        # batch is the only parallel axis now)


# --------------------------------------------------------------------------- #
# Wrapper
# --------------------------------------------------------------------------- #
def attn_block(query, value, params, *, infer=False, causal=True):
    """Pallas implementation of AttnBlock.forward.  query, value: (B, T, D) f32."""
    assert causal, "only the causal=True path is implemented (module default)"
    B, T, D = query.shape
    assert value.shape == (B, T, D)

    # ---- tiny (D,)-vector parameter glue in plain JAX ----
    q_vec = jax.nn.sigmoid(params["query_vector"])
    k_vec = jax.nn.sigmoid(params["key_vector"])
    v_vec = jax.nn.sigmoid(params["value_vector"])
    if not infer:
        v_sigm = jax.nn.sigmoid(v_vec @ params["Wvs"].T + params["bvs"])
        v_tanh = jnp.tanh(v_vec @ params["Wvt"].T + params["bvt"])
        v_vec = v_sigm * v_tanh

    # Fold the query gate and the 1/sqrt(D) score scale into the LayerNorm affine:
    #   ((LN(x)*gamma + beta) * sigmoid(q_vec)) @ K^T / sqrt(D) == (LN(x)*g' + b') @ K^T
    scale = 1.0 / math.sqrt(D)
    gamma_f = (params["ln_gamma"] * q_vec * scale).reshape(1, D).astype(jnp.float32)
    beta_f = (params["ln_beta"] * q_vec * scale).reshape(1, D).astype(jnp.float32)
    wq_t = params["Wq"].T.astype(jnp.bfloat16)            # (D_in, D_out); bf16 MXU path
    bq = params["bq"].reshape(1, D).astype(jnp.float32)   # bias stays f32 (accuracy, tiny)
    k_vec = k_vec.reshape(1, D).astype(jnp.bfloat16)
    v_vec = v_vec.reshape(1, D).astype(jnp.bfloat16)

    # ---- tiling ----
    chip = _chip_params()
    tq, t_pad = _choose_tq(T)
    nq = t_pad // tq
    bb = _choose_bb(B, tq, D, chip["bb_budget"], chip["two_cores"])
    nb = (B + bb - 1) // bb
    b_pad = nb * bb

    if (b_pad, t_pad) != (B, T):
        pad = ((0, b_pad - B), (0, t_pad - T), (0, 0))
        query = jnp.pad(query, pad)
        value = jnp.pad(value, pad)
    # bf16 inputs: halves the repeated KV HBM stream and the q DMA.
    query = query.astype(jnp.bfloat16)
    value = value.astype(jnp.bfloat16)

    # Triangular (q, k<=q) enumeration, q-major so every output block's k-steps are
    # consecutive (standard accumulator revisit pattern on the "arbitrary" axis).
    tri = [(q, k) for q in range(nq) for k in range(q + 1)]
    q_idx = jnp.asarray([q for q, _ in tri], dtype=jnp.int32)
    k_idx = jnp.asarray([k for _, k in tri], dtype=jnp.int32)
    n_tri = len(tri)

    qo_spec = pl.BlockSpec((bb, tq, D), lambda b, t, qi, ki: (b, qi[t], 0))
    kv_spec = pl.BlockSpec((bb, tq, D), lambda b, t, qi, ki: (b, ki[t], 0))
    mat_spec = pl.BlockSpec((D, D), lambda b, t, qi, ki: (0, 0))
    vec_spec = pl.BlockSpec((1, D), lambda b, t, qi, ki: (0, 0))

    out = pl.pallas_call(
        _attn_kernel,
        out_shape=jax.ShapeDtypeStruct((b_pad, t_pad, D), jnp.float32),
        grid_spec=pltpu.PrefetchScalarGridSpec(
            num_scalar_prefetch=2,
            grid=(nb, n_tri),
            in_specs=[qo_spec, kv_spec, mat_spec, vec_spec, vec_spec,
                      vec_spec, vec_spec, vec_spec],
            out_specs=qo_spec,
            scratch_shapes=[
                pltpu.VMEM((bb, tq, D), jnp.bfloat16),   # gated/normalized query
                pltpu.VMEM((bb, tq, 1), jnp.float32),    # running max
                pltpu.VMEM((bb, tq, 1), jnp.float32),    # running denominator
                pltpu.VMEM((bb, tq, D), jnp.float32),    # output accumulator
            ],
        ),
        compiler_params=pltpu.CompilerParams(
            dimension_semantics=("parallel", "arbitrary"),
            # always set: v5e's default scoped-VMEM ceiling is only 16 MiB.
            vmem_limit_bytes=int(chip["vmem_limit"]),
        ),
    )(q_idx, k_idx, query, value, wq_t, bq, gamma_f, beta_f, k_vec, v_vec)
    return out[:B, :T]


# --------------------------------------------------------------------------- #
# Parameters + pure-JAX reference
# --------------------------------------------------------------------------- #
def init_params(key, D):
    """Deterministic synthetic parameters matching the module's shapes."""
    ks = jax.random.split(key, 8)
    stdv = 1.0 / math.sqrt(D)
    lin_bound = 1.0 / math.sqrt(D)
    u = lambda k, shape, b: jax.random.uniform(k, shape, jnp.float32, -b, b)
    return {
        "query_vector": u(ks[0], (D,), stdv),
        "key_vector":   u(ks[1], (D,), stdv),
        "value_vector": u(ks[2], (D,), stdv),
        "Wq":  u(ks[3], (D, D), lin_bound),   # nn.Linear weight (out, in)
        "bq":  u(ks[4], (D,), lin_bound),
        "ln_gamma": jnp.ones((D,), jnp.float32),
        "ln_beta":  jnp.zeros((D,), jnp.float32),
        "Wvs": u(ks[5], (D, D), lin_bound),
        "bvs": u(ks[6], (D,), lin_bound),
        "Wvt": u(ks[7], (D, D), lin_bound),
        "bvt": jnp.zeros((D,), jnp.float32),
    }


def attn_block_reference(query, value, params, *, infer=False):
    """Pure-JAX reference of the PyTorch forward (causal=True)."""
    D = query.shape[-1]
    q = query @ params["Wq"].T + params["bq"]
    mean = jnp.mean(q, axis=-1, keepdims=True)
    var = jnp.mean((q - mean) ** 2, axis=-1, keepdims=True)
    q = (q - mean) / jnp.sqrt(var + LN_EPS)
    q = q * params["ln_gamma"] + params["ln_beta"]
    q = q * jax.nn.sigmoid(params["query_vector"])
    key = value * jax.nn.sigmoid(params["key_vector"])
    v_vec = jax.nn.sigmoid(params["value_vector"])
    if not infer:
        v_sigm = jax.nn.sigmoid(v_vec @ params["Wvs"].T + params["bvs"])
        v_tanh = jnp.tanh(v_vec @ params["Wvt"].T + params["bvt"])
        v_vec = v_sigm * v_tanh
    val = value * v_vec
    w = jnp.einsum("btd,bsd->bts", q, key) / math.sqrt(D)
    T = w.shape[-1]
    mask = jnp.triu(jnp.ones((T, T), bool), k=1)
    w = jnp.where(mask, -jnp.inf, w)
    w = jax.nn.softmax(w, axis=-1)
    return jnp.einsum("bts,bsd->btd", w, val)


# --------------------------------------------------------------------------- #
# Demo / self-check
# --------------------------------------------------------------------------- #
def _check(B, T, D, key):
    kq, kv, kp = jax.random.split(key, 3)
    query = jax.random.normal(kq, (B, T, D), jnp.float32)
    value = jax.random.normal(kv, (B, T, D), jnp.float32)
    params = init_params(kp, D)

    out = jax.block_until_ready(attn_block(query, value, params))
    ref = attn_block_reference(query, value, params)
    assert out.shape == (B, T, D)
    err = float(jnp.max(jnp.abs(out - ref)))
    # bf16 inputs / matmuls / exp (all with f32 accumulation) loosen the match vs. the
    # pure-f32 reference.
    assert jnp.allclose(out, ref, atol=3e-2, rtol=3e-2), (
        f"mismatch vs reference at (B,T,D)=({B},{T},{D}), max abs err={err}")


if __name__ == "__main__":
    key = jax.random.PRNGKey(0)
    k1, k2, k3 = jax.random.split(key, 3)
    # prescribed small shape: single q/kv tile, one triangular step
    _check(B=2, T=8, D=32, key=k1)
    # multi-tile triangular grid with tq=256 (nq=2, 3 steps) and batch padding on v7x
    _check(B=3, T=512, D=32, key=k2)
    # non-divisible T: padded to 384 with tq=128 (nq=3, 6 triangular steps)
    _check(B=2, T=300, D=32, key=k3)
    print("KERNEL_OK")
</pallas_src>

<mosaic_0001>
module attributes {stable_mosaic.version = 11 : i64} {
  func.func @_attn_kernel(%arg0: i32, %arg1: i32, %arg2: memref<1xi32, #tpu.memory_space<smem>>, %arg3: memref<1xi32, #tpu.memory_space<smem>>, %arg4: memref<2x8x32xbf16, #tpu.memory_space<vmem>>, %arg5: memref<2x8x32xbf16, #tpu.memory_space<vmem>>, %arg6: memref<32x32xbf16, #tpu.memory_space<vmem>>, %arg7: memref<1x32xf32, #tpu.memory_space<vmem>>, %arg8: memref<1x32xf32, #tpu.memory_space<vmem>>, %arg9: memref<1x32xf32, #tpu.memory_space<vmem>>, %arg10: memref<1x32xbf16, #tpu.memory_space<vmem>>, %arg11: memref<1x32xbf16, #tpu.memory_space<vmem>>, %arg12: memref<2x8x32xf32, #tpu.memory_space<vmem>>, %arg13: memref<2x8x32xbf16, #tpu.memory_space<vmem>>, %arg14: memref<2x8x1xf32, #tpu.memory_space<vmem>>, %arg15: memref<2x8x1xf32, #tpu.memory_space<vmem>>, %arg16: memref<2x8x32xf32, #tpu.memory_space<vmem>>) attributes {dimension_semantics = [#tpu.dimension_semantics<parallel>, #tpu.dimension_semantics<arbitrary>], iteration_bounds = array<i64: 1, 1>, scalar_prefetch = 2 : i64, scratch_operands = 4 : i64, tpu.core_type = #tpu.core_type<tc>, window_params = [{transform_indices = @transform_0, window_bounds = array<i64: 2, 8, 32>}, {transform_indices = @transform_1, window_bounds = array<i64: 2, 8, 32>}, {pipeline_mode = #tpu.pipeline_mode<synchronous>, transform_indices = @transform_2, window_bounds = array<i64: 32, 32>}, {pipeline_mode = #tpu.pipeline_mode<synchronous>, transform_indices = @transform_3, window_bounds = array<i64: 1, 32>}, {pipeline_mode = #tpu.pipeline_mode<synchronous>, transform_indices = @transform_4, window_bounds = array<i64: 1, 32>}, {pipeline_mode = #tpu.pipeline_mode<synchronous>, transform_indices = @transform_5, window_bounds = array<i64: 1, 32>}, {pipeline_mode = #tpu.pipeline_mode<synchronous>, transform_indices = @transform_6, window_bounds = array<i64: 1, 32>}, {pipeline_mode = #tpu.pipeline_mode<synchronous>, transform_indices = @transform_7, window_bounds = array<i64: 1, 32>}, {transform_indices = @transform_8, window_bounds = array<i64: 2, 8, 32>}]} {
    %0 = arith.index_cast %arg1 : i32 to index
    %1 = memref.load %arg2[%0] : memref<1xi32, #tpu.memory_space<smem>>
    %2 = arith.index_cast %arg1 : i32 to index
    %3 = memref.load %arg3[%2] : memref<1xi32, #tpu.memory_space<smem>>
    %c0_i32 = arith.constant 0 : i32
    %4 = arith.cmpi eq, %3, %c0_i32 : i32
    %5 = arith.extui %4 : i1 to i32
    %c0_i32_0 = arith.constant 0 : i32
    %6 = arith.cmpi ne, %5, %c0_i32_0 : i32
    scf.if %6 {
      %cst_12 = arith.constant 0xFF800000 : f32
      %24 = vector.broadcast %cst_12 : f32 to vector<2x8x1xf32>
      %c0_13 = arith.constant 0 : index
      %c0_14 = arith.constant 0 : index
      %c0_15 = arith.constant 0 : index
      %25 = vector.load %arg14[%c0_13, %c0_14, %c0_15] : memref<2x8x1xf32, #tpu.memory_space<vmem>>, vector<2x8x1xf32>
      tpu.vector_store %arg14[%c0_13, %c0_14, %c0_15], %24 {strides = array<i32>} : memref<2x8x1xf32, #tpu.memory_space<vmem>>, vector<2x8x1xf32>,
      %cst_16 = arith.constant 0.000000e+00 : f32
      %26 = vector.broadcast %cst_16 : f32 to vector<2x8x1xf32>
      %c0_17 = arith.constant 0 : index
      %c0_18 = arith.constant 0 : index
      %c0_19 = arith.constant 0 : index
      %27 = vector.load %arg15[%c0_17, %c0_18, %c0_19] : memref<2x8x1xf32, #tpu.memory_space<vmem>>, vector<2x8x1xf32>
      tpu.vector_store %arg15[%c0_17, %c0_18, %c0_19], %26 {strides = array<i32>} : memref<2x8x1xf32, #tpu.memory_space<vmem>>, vector<2x8x1xf32>,
      %cst_20 = arith.constant 0.000000e+00 : f32
      %28 = vector.broadcast %cst_20 : f32 to vector<2x8x32xf32>
      %c0_21 = arith.constant 0 : index
      %c0_22 = arith.constant 0 : index
      %c0_23 = arith.constant 0 : index
      %29 = vector.load %arg16[%c0_21, %c0_22, %c0_23] : memref<2x8x32xf32, #tpu.memory_space<vmem>>, vector<2x8x32xf32>
      tpu.vector_store %arg16[%c0_21, %c0_22, %c0_23], %28 {strides = array<i32>} : memref<2x8x32xf32, #tpu.memory_space<vmem>>, vector<2x8x32xf32>,
      %c0_24 = arith.constant 0 : index
      %c0_25 = arith.constant 0 : index
      %c0_26 = arith.constant 0 : index
      %30 = vector.load %arg4[%c0_24, %c0_25, %c0_26] : memref<2x8x32xbf16, #tpu.memory_space<vmem>>, vector<2x8x32xbf16>
      %31 = vector.shape_cast %30 : vector<2x8x32xbf16> to vector<16x32xbf16>
      %c0_27 = arith.constant 0 : index
      %c0_28 = arith.constant 0 : index
      %32 = vector.load %arg6[%c0_27, %c0_28] : memref<32x32xbf16, #tpu.memory_space<vmem>>, vector<32x32xbf16>
      %cst_29 = arith.constant dense<0.000000e+00> : vector<16x32xf32>
      %33 = tpu.matmul %31, %32, %cst_29 {dimension_numbers = #tpu.dot_dimension_numbers<[1], [0], [0], [1], [0, 0, 1, 1], [], []>} : vector<16x32xbf16>, vector<32x32xbf16>, vector<16x32xf32> -> vector<16x32xf32>
      %c0_30 = arith.constant 0 : index
      %c0_31 = arith.constant 0 : index
      %34 = vector.load %arg7[%c0_30, %c0_31] : memref<1x32xf32, #tpu.memory_space<vmem>>, vector<1x32xf32>
      %35 = vector.broadcast %34 : vector<1x32xf32> to vector<16x32xf32>
      %36 = arith.addf %33, %35 : vector<16x32xf32>
      %cst_32 = arith.constant dense<0.000000e+00> : vector<16xf32>
      %37 = vector.multi_reduction <add>, %36, %cst_32 [1] : vector<16x32xf32> to vector<16xf32>
      %38 = vector.shape_cast %37 : vector<16xf32> to vector<16x1xf32>
      %cst_33 = arith.constant 3.200000e+01 : f32
      %39 = vector.broadcast %cst_33 : f32 to vector<16x1xf32>
      %40 = arith.divf %38, %39 : vector<16x1xf32>
      %41 = vector.broadcast %40 : vector<16x1xf32> to vector<16x32xf32>
      %42 = arith.subf %36, %41 : vector<16x32xf32>
      %43 = arith.mulf %42, %42 : vector<16x32xf32>
      %cst_34 = arith.constant dense<0.000000e+00> : vector<16xf32>
      %44 = vector.multi_reduction <add>, %43, %cst_34 [1] : vector<16x32xf32> to vector<16xf32>
      %45 = vector.shape_cast %44 : vector<16xf32> to vector<16x1xf32>
      %cst_35 = arith.constant 3.200000e+01 : f32
      %46 = vector.broadcast %cst_35 : f32 to vector<16x1xf32>
      %47 = arith.divf %45, %46 : vector<16x1xf32>
      %cst_36 = arith.constant 9.99999974E-6 : f32
      %48 = vector.broadcast %cst_36 : f32 to vector<16x1xf32>
      %49 = arith.addf %47, %48 : vector<16x1xf32>
      %50 = math.rsqrt %49 : vector<16x1xf32>
      %51 = vector.broadcast %50 : vector<16x1xf32> to vector<16x32xf32>
      %52 = arith.mulf %42, %51 : vector<16x32xf32>
      %c0_37 = arith.constant 0 : index
      %c0_38 = arith.constant 0 : index
      %53 = vector.load %arg8[%c0_37, %c0_38] : memref<1x32xf32, #tpu.memory_space<vmem>>, vector<1x32xf32>
      %54 = vector.broadcast %53 : vector<1x32xf32> to vector<16x32xf32>
      %55 = arith.mulf %52, %54 : vector<16x32xf32>
      %c0_39 = arith.constant 0 : index
      %c0_40 = arith.constant 0 : index
      %56 = vector.load %arg9[%c0_39, %c0_40] : memref<1x32xf32, #tpu.memory_space<vmem>>, vector<1x32xf32>
      %57 = vector.broadcast %56 : vector<1x32xf32> to vector<16x32xf32>
      %58 = arith.addf %55, %57 : vector<16x32xf32>
      %59 = vector.shape_cast %58 : vector<16x32xf32> to vector<2x8x32xf32>
      %60 = arith.truncf %59 : vector<2x8x32xf32> to vector<2x8x32xbf16>
      %c0_41 = arith.constant 0 : index
      %c0_42 = arith.constant 0 : index
      %c0_43 = arith.constant 0 : index
      %61 = vector.load %arg13[%c0_41, %c0_42, %c0_43] : memref<2x8x32xbf16, #tpu.memory_space<vmem>>, vector<2x8x32xbf16>
      tpu.vector_store %arg13[%c0_41, %c0_42, %c0_43], %60 {strides = array<i32>} : memref<2x8x32xbf16, #tpu.memory_space<vmem>>, vector<2x8x32xbf16>,
    } else {
    }
    %c0 = arith.constant 0 : index
    %c0_1 = arith.constant 0 : index
    %c0_2 = arith.constant 0 : index
    %7 = vector.load %arg5[%c0, %c0_1, %c0_2] : memref<2x8x32xbf16, #tpu.memory_space<vmem>>, vector<2x8x32xbf16>
    %c0_3 = arith.constant 0 : index
    %c0_4 = arith.constant 0 : index
    %8 = vector.load %arg10[%c0_3, %c0_4] : memref<1x32xbf16, #tpu.memory_space<vmem>>, vector<1x32xbf16>
    %9 = vector.shape_cast %8 : vector<1x32xbf16> to vector<1x1x32xbf16>
    %10 = vector.broadcast %9 : vector<1x1x32xbf16> to vector<2x8x32xbf16>
    %11 = arith.mulf %7, %10 : vector<2x8x32xbf16>
    %c0_5 = arith.constant 0 : index
    %c0_6 = arith.constant 0 : index
    %12 = vector.load %arg11[%c0_5, %c0_6] : memref<1x32xbf16, #tpu.memory_space<vmem>>, vector<1x32xbf16>
    %13 = vector.shape_cast %12 : vector<1x32xbf16> to vector<1x1x32xbf16>
    %14 = vector.broadcast %13 : vector<1x1x32xbf16> to vector<2x8x32xbf16>
    %15 = arith.mulf %7, %14 : vector<2x8x32xbf16>
    %c0_7 = arith.constant 0 : index
    %c0_8 = arith.constant 0 : index
    %c0_9 = arith.constant 0 : index
    %16 = vector.load %arg13[%c0_7, %c0_8, %c0_9] : memref<2x8x32xbf16, #tpu.memory_space<vmem>>, vector<2x8x32xbf16>
    "tpu.trace_start"() <{level = 10 : i32, message = "bqd,bkd->bqk"}> : () -> ()
    %cst = arith.constant dense<0.000000e+00> : vector<2x8x8xf32>
    %17 = tpu.matmul %16, %11, %cst {dimension_numbers = #tpu.dot_dimension_numbers<[2], [2], [1], [1], [0, 0, 0, 1, 1, 1], [0], [0]>} : vector<2x8x32xbf16>, vector<2x8x32xbf16>, vector<2x8x8xf32> -> vector<2x8x8xf32>
    "tpu.trace_stop"() : () -> ()
    %18 = arith.cmpi slt, %3, %1 : i32
    %19 = arith.extui %18 : i1 to i32
    %c0_i32_10 = arith.constant 0 : i32
    %20 = arith.cmpi ne, %19, %c0_i32_10 : i32
    scf.if %20 {
      %c0_12 = arith.constant 0 : index
      %c0_13 = arith.constant 0 : index
      %c0_14 = arith.constant 0 : index
      %24 = vector.load %arg14[%c0_12, %c0_13, %c0_14] : memref<2x8x1xf32, #tpu.memory_space<vmem>>, vector<2x8x1xf32>
      %c0_15 = arith.constant 0 : index
      %c0_16 = arith.constant 0 : index
      %c0_17 = arith.constant 0 : index
      %25 = vector.load %arg15[%c0_15, %c0_16, %c0_17] : memref<2x8x1xf32, #tpu.memory_space<vmem>>, vector<2x8x1xf32>
      %c0_18 = arith.constant 0 : index
      %c0_19 = arith.constant 0 : index
      %c0_20 = arith.constant 0 : index
      %26 = vector.load %arg16[%c0_18, %c0_19, %c0_20] : memref<2x8x32xf32, #tpu.memory_space<vmem>>, vector<2x8x32xf32>
      %cst_21 = arith.constant dense<0xFF800000> : vector<2x8xf32>
      %27 = vector.multi_reduction <maximumf>, %17, %cst_21 [2] : vector<2x8x8xf32> to vector<2x8xf32>
      %28 = vector.shape_cast %27 : vector<2x8xf32> to vector<2x8x1xf32>
      %29 = arith.maximumf %24, %28 : vector<2x8x1xf32>
      %30 = arith.subf %24, %29 : vector<2x8x1xf32>
      %31 = math.exp %30 : vector<2x8x1xf32>
      %32 = vector.broadcast %29 : vector<2x8x1xf32> to vector<2x8x8xf32>
      %33 = arith.subf %17, %32 : vector<2x8x8xf32>
      %34 = arith.truncf %33 : vector<2x8x8xf32> to vector<2x8x8xbf16>
      %35 = math.exp %34 : vector<2x8x8xbf16>
      %36 = arith.mulf %31, %25 : vector<2x8x1xf32>
      %37 = arith.extf %35 : vector<2x8x8xbf16> to vector<2x8x8xf32>
      %cst_22 = arith.constant dense<0.000000e+00> : vector<2x8xf32>
      %38 = vector.multi_reduction <add>, %37, %cst_22 [2] : vector<2x8x8xf32> to vector<2x8xf32>
      %39 = vector.shape_cast %38 : vector<2x8xf32> to vector<2x8x1xf32>
      %40 = arith.addf %36, %39 : vector<2x8x1xf32>
      %41 = vector.broadcast %31 : vector<2x8x1xf32> to vector<2x8x32xf32>
      %42 = arith.mulf %41, %26 : vector<2x8x32xf32>
      "tpu.trace_start"() <{level = 10 : i32, message = "bqk,bkd->bqd"}> : () -> ()
      %cst_23 = arith.constant dense<0.000000e+00> : vector<2x8x32xf32>
      %43 = tpu.matmul %35, %15, %cst_23 {dimension_numbers = #tpu.dot_dimension_numbers<[2], [1], [1], [2], [0, 0, 0, 1, 1, 2], [0], [0]>} : vector<2x8x8xbf16>, vector<2x8x32xbf16>, vector<2x8x32xf32> -> vector<2x8x32xf32>
      "tpu.trace_stop"() : () -> ()
      %44 = arith.addf %42, %43 : vector<2x8x32xf32>
      %c0_24 = arith.constant 0 : index
      %c0_25 = arith.constant 0 : index
      %c0_26 = arith.constant 0 : index
      %45 = vector.load %arg14[%c0_24, %c0_25, %c0_26] : memref<2x8x1xf32, #tpu.memory_space<vmem>>, vector<2x8x1xf32>
      tpu.vector_store %arg14[%c0_24, %c0_25, %c0_26], %29 {strides = array<i32>} : memref<2x8x1xf32, #tpu.memory_space<vmem>>, vector<2x8x1xf32>,
      %c0_27 = arith.constant 0 : index
      %c0_28 = arith.constant 0 : index
      %c0_29 = arith.constant 0 : index
      %46 = vector.load %arg15[%c0_27, %c0_28, %c0_29] : memref<2x8x1xf32, #tpu.memory_space<vmem>>, vector<2x8x1xf32>
      tpu.vector_store %arg15[%c0_27, %c0_28, %c0_29], %40 {strides = array<i32>} : memref<2x8x1xf32, #tpu.memory_space<vmem>>, vector<2x8x1xf32>,
      %c0_30 = arith.constant 0 : index
      %c0_31 = arith.constant 0 : index
      %c0_32 = arith.constant 0 : index
      %47 = vector.load %arg16[%c0_30, %c0_31, %c0_32] : memref<2x8x32xf32, #tpu.memory_space<vmem>>, vector<2x8x32xf32>
      tpu.vector_store %arg16[%c0_30, %c0_31, %c0_32], %44 {strides = array<i32>} : memref<2x8x32xf32, #tpu.memory_space<vmem>>, vector<2x8x32xf32>,
    } else {
    }
    %21 = arith.cmpi eq, %3, %1 : i32
    %22 = arith.extui %21 : i1 to i32
    %c0_i32_11 = arith.constant 0 : i32
    %23 = arith.cmpi ne, %22, %c0_i32_11 : i32
    scf.if %23 {
      %24 = tpu.iota {dimensions = array<i32: 0>} : vector<8x8xi32>
      %25 = tpu.iota {dimensions = array<i32: 1>} : vector<8x8xi32>
      %26 = arith.cmpi sle, %25, %24 : vector<8x8xi32>
      %27 = vector.shape_cast %26 : vector<8x8xi1> to vector<1x8x8xi1>
      %cst_12 = arith.constant 0xFF800000 : f32
      %28 = vector.shape_cast %27 : vector<1x8x8xi1> to vector<1x8x8xi1>
      %29 = vector.broadcast %28 : vector<1x8x8xi1> to vector<2x8x8xi1>
      %30 = vector.broadcast %cst_12 : f32 to vector<2x8x8xf32>
      %31 = arith.select %29, %17, %30 : vector<2x8x8xi1>, vector<2x8x8xf32>
      %c0_13 = arith.constant 0 : index
      %c0_14 = arith.constant 0 : index
      %c0_15 = arith.constant 0 : index
      %32 = vector.load %arg14[%c0_13, %c0_14, %c0_15] : memref<2x8x1xf32, #tpu.memory_space<vmem>>, vector<2x8x1xf32>
      %c0_16 = arith.constant 0 : index
      %c0_17 = arith.constant 0 : index
      %c0_18 = arith.constant 0 : index
      %33 = vector.load %arg15[%c0_16, %c0_17, %c0_18] : memref<2x8x1xf32, #tpu.memory_space<vmem>>, vector<2x8x1xf32>
      %c0_19 = arith.constant 0 : index
      %c0_20 = arith.constant 0 : index
      %c0_21 = arith.constant 0 : index
      %34 = vector.load %arg16[%c0_19, %c0_20, %c0_21] : memref<2x8x32xf32, #tpu.memory_space<vmem>>, vector<2x8x32xf32>
      %cst_22 = arith.constant dense<0xFF800000> : vector<2x8xf32>
      %35 = vector.multi_reduction <maximumf>, %31, %cst_22 [2] : vector<2x8x8xf32> to vector<2x8xf32>
      %36 = vector.shape_cast %35 : vector<2x8xf32> to vector<2x8x1xf32>
      %37 = arith.maximumf %32, %36 : vector<2x8x1xf32>
      %38 = arith.subf %32, %37 : vector<2x8x1xf32>
      %39 = math.exp %38 : vector<2x8x1xf32>
      %40 = vector.broadcast %37 : vector<2x8x1xf32> to vector<2x8x8xf32>
      %41 = arith.subf %31, %40 : vector<2x8x8xf32>
      %42 = arith.truncf %41 : vector<2x8x8xf32> to vector<2x8x8xbf16>
      %43 = math.exp %42 : vector<2x8x8xbf16>
      %44 = arith.mulf %39, %33 : vector<2x8x1xf32>
      %45 = arith.extf %43 : vector<2x8x8xbf16> to vector<2x8x8xf32>
      %cst_23 = arith.constant dense<0.000000e+00> : vector<2x8xf32>
      %46 = vector.multi_reduction <add>, %45, %cst_23 [2] : vector<2x8x8xf32> to vector<2x8xf32>
      %47 = vector.shape_cast %46 : vector<2x8xf32> to vector<2x8x1xf32>
      %48 = arith.addf %44, %47 : vector<2x8x1xf32>
      %49 = vector.broadcast %39 : vector<2x8x1xf32> to vector<2x8x32xf32>
      %50 = arith.mulf %49, %34 : vector<2x8x32xf32>
      "tpu.trace_start"() <{level = 10 : i32, message = "bqk,bkd->bqd"}> : () -> ()
      %cst_24 = arith.constant dense<0.000000e+00> : vector<2x8x32xf32>
      %51 = tpu.matmul %43, %15, %cst_24 {dimension_numbers = #tpu.dot_dimension_numbers<[2], [1], [1], [2], [0, 0, 0, 1, 1, 2], [0], [0]>} : vector<2x8x8xbf16>, vector<2x8x32xbf16>, vector<2x8x32xf32> -> vector<2x8x32xf32>
      "tpu.trace_stop"() : () -> ()
      %52 = arith.addf %50, %51 : vector<2x8x32xf32>
      %53 = tpu.reciprocal %48 {approx = true} : vector<2x8x1xf32> -> vector<2x8x1xf32>
      %54 = vector.broadcast %53 : vector<2x8x1xf32> to vector<2x8x32xf32>
      %55 = arith.mulf %52, %54 : vector<2x8x32xf32>
      %c0_25 = arith.constant 0 : index
      %c0_26 = arith.constant 0 : index
      %c0_27 = arith.constant 0 : index
      %56 = vector.load %arg12[%c0_25, %c0_26, %c0_27] : memref<2x8x32xf32, #tpu.memory_space<vmem>>, vector<2x8x32xf32>
      tpu.vector_store %arg12[%c0_25, %c0_26, %c0_27], %55 {strides = array<i32>} : memref<2x8x32xf32, #tpu.memory_space<vmem>>, vector<2x8x32xf32>,
    } else {
    }
    return
  }
  func.func @transform_0(%arg0: i32, %arg1: i32, %arg2: memref<1xi32, #tpu.memory_space<smem>>, %arg3: memref<1xi32, #tpu.memory_space<smem>>) -> (i32, i32, i32) {
    %0 = arith.index_cast %arg1 : i32 to index
    %1 = memref.load %arg2[%0] : memref<1xi32, #tpu.memory_space<smem>>
    %c0_i32 = arith.constant 0 : i32
    %c0_i32_0 = arith.constant 0 : i32
    return %arg0, %1, %c0_i32 : i32, i32, i32
  }
  func.func @transform_1(%arg0: i32, %arg1: i32, %arg2: memref<1xi32, #tpu.memory_space<smem>>, %arg3: memref<1xi32, #tpu.memory_space<smem>>) -> (i32, i32, i32) {
    %0 = arith.index_cast %arg1 : i32 to index
    %1 = memref.load %arg3[%0] : memref<1xi32, #tpu.memory_space<smem>>
    %c0_i32 = arith.constant 0 : i32
    %c0_i32_0 = arith.constant 0 : i32
    return %arg0, %1, %c0_i32 : i32, i32, i32
  }
  func.func @transform_2(%arg0: i32, %arg1: i32, %arg2: memref<1xi32, #tpu.memory_space<smem>>, %arg3: memref<1xi32, #tpu.memory_space<smem>>) -> (i32, i32) {
    %c0_i32 = arith.constant 0 : i32
    %c0_i32_0 = arith.constant 0 : i32
    %c0_i32_1 = arith.constant 0 : i32
    return %c0_i32, %c0_i32_0 : i32, i32
  }
  func.func @transform_3(%arg0: i32, %arg1: i32, %arg2: memref<1xi32, #tpu.memory_space<smem>>, %arg3: memref<1xi32, #tpu.memory_space<smem>>) -> (i32, i32) {
    %c0_i32 = arith.constant 0 : i32
    %c0_i32_0 = arith.constant 0 : i32
    %c0_i32_1 = arith.constant 0 : i32
    return %c0_i32, %c0_i32_0 : i32, i32
  }
  func.func @transform_4(%arg0: i32, %arg1: i32, %arg2: memref<1xi32, #tpu.memory_space<smem>>, %arg3: memref<1xi32, #tpu.memory_space<smem>>) -> (i32, i32) {
    %c0_i32 = arith.constant 0 : i32
    %c0_i32_0 = arith.constant 0 : i32
    %c0_i32_1 = arith.constant 0 : i32
    return %c0_i32, %c0_i32_0 : i32, i32
  }
  func.func @transform_5(%arg0: i32, %arg1: i32, %arg2: memref<1xi32, #tpu.memory_space<smem>>, %arg3: memref<1xi32, #tpu.memory_space<smem>>) -> (i32, i32) {
    %c0_i32 = arith.constant 0 : i32
    %c0_i32_0 = arith.constant 0 : i32
    %c0_i32_1 = arith.constant 0 : i32
    return %c0_i32, %c0_i32_0 : i32, i32
  }
  func.func @transform_6(%arg0: i32, %arg1: i32, %arg2: memref<1xi32, #tpu.memory_space<smem>>, %arg3: memref<1xi32, #tpu.memory_space<smem>>) -> (i32, i32) {
    %c0_i32 = arith.constant 0 : i32
    %c0_i32_0 = arith.constant 0 : i32
    %c0_i32_1 = arith.constant 0 : i32
    return %c0_i32, %c0_i32_0 : i32, i32
  }
  func.func @transform_7(%arg0: i32, %arg1: i32, %arg2: memref<1xi32, #tpu.memory_space<smem>>, %arg3: memref<1xi32, #tpu.memory_space<smem>>) -> (i32, i32) {
    %c0_i32 = arith.constant 0 : i32
    %c0_i32_0 = arith.constant 0 : i32
    %c0_i32_1 = arith.constant 0 : i32
    return %c0_i32, %c0_i32_0 : i32, i32
  }
  func.func @transform_8(%arg0: i32, %arg1: i32, %arg2: memref<1xi32, #tpu.memory_space<smem>>, %arg3: memref<1xi32, #tpu.memory_space<smem>>) -> (i32, i32, i32) {
    %0 = arith.index_cast %arg1 : i32 to index
    %1 = memref.load %arg2[%0] : memref<1xi32, #tpu.memory_space<smem>>
    %c0_i32 = arith.constant 0 : i32
    %c0_i32_0 = arith.constant 0 : i32
    return %arg0, %1, %c0_i32 : i32, i32, i32
  }
}

</mosaic_0001>

<llo_original>
// kernel: tpu_custom_call.1
$region0: #{tpu_custom_call.1}
  #allocation0 [shape = 'u32[]', space=smem, size = 0x4, offset = 0x4, fixed_abs, tag = 'smem constant byte address 0x4 - core index']
  #allocation1 [shape = 'u32[72,128]{1,0:T(1,128)}', space=vmem, size = 0x9000, scoped, tag = 'internal scratch']
  #allocation2 [shape = 'bf16[2,8,32]{2,1,0:T(8,128)(2,1)}', space=vmem, size = 0x1000, scoped, tag = 'scratch operand']
  #allocation3 [shape = 'f32[2,8,1]{2,1,0:T(8,128)}', space=vmem, size = 0x2000, scoped, tag = 'scratch operand']
  #allocation4 [shape = 'f32[2,8,1]{2,1,0:T(8,128)}', space=vmem, size = 0x2000, scoped, tag = 'scratch operand']
  #allocation5 [shape = 'f32[2,8,32]{2,1,0:T(8,128)}', space=vmem, size = 0x2000, scoped, tag = 'scratch operand']
  #allocation6 [shape = 's32[1]{0}', space=sflag, size = 0x4, scoped, tag = 'scoped memory for tpu_custom_call.1']
  #allocation7 [shape = 's32[1]{0:T(128)S(6)}', space=smem, size = 0x200, scoped, tag = 'prefetched SMEM operand 0']
  #allocation8 [shape = 's32[1]{0:T(128)S(6)}', space=smem, size = 0x200, scoped, tag = 'prefetched SMEM operand 1']
  %s0 = inlined_call_operand.<no memory space> [shape: s32[1], index: 0, kind: input, shape index: {}]
  %s1 = inlined_call_operand.<no memory space> [shape: s32[1], index: 1, kind: input, shape index: {}]
  %s2 = inlined_call_operand.hbm [shape: bf16[2,8,32], index: 2, kind: input, shape index: {}]
  %s3 = inlined_call_operand.hbm [shape: bf16[2,8,32], index: 3, kind: input, shape index: {}]
  %s4 = inlined_call_operand.hbm [shape: bf16[32,32], index: 4, kind: input, shape index: {}]
  %s5 = inlined_call_operand.vmem [shape: f32[1,32], index: 5, kind: input, shape index: {}]
  %s6 = inlined_call_operand.vmem [shape: f32[1,32], index: 6, kind: input, shape index: {}]
  %s7 = inlined_call_operand.vmem [shape: f32[1,32], index: 7, kind: input, shape index: {}]
  %s8 = inlined_call_operand.vmem [shape: bf16[1,32], index: 8, kind: input, shape index: {}]
  %s9 = inlined_call_operand.vmem [shape: bf16[1,32], index: 9, kind: input, shape index: {}]
  %s10 = inlined_call_operand.hbm [shape: f32[2,8,32], index: 10, kind: output, shape index: {}]
  %s11 = sld [smem:[#allocation0]]
  $region66: #{tpu_custom_call.1} parent=0
    _
  %s13 = ssub.s32 1, %s11
  %s14 = scalar_select 0, %s13, %s11
  %15 = sst [smem:[#allocation7]] %s0
  %16 = sst [smem:[#allocation8]] %s1
  $region1: #{tpu_custom_call.1} parent=0
    #allocation9 [shape = 'u8[4096]{0}', space=vmem, size = 0x1000, scoped, tag = 'input window, operand 2, single buffered']
    #allocation10 [shape = 's32[1]{0}', space=sflag, size = 0x4, scoped, tag = 'scoped memory for tpu_custom_call.1']
    #allocation11 [shape = 's32[1]{0}', space=sflag, size = 0x4, scoped, tag = 'scoped memory for tpu_custom_call.1']
    #allocation12 [shape = 'u8[4096]{0}', space=vmem, size = 0x1000, scoped, tag = 'input window, operand 3, single buffered']
    #allocation13 [shape = 's32[1]{0}', space=sflag, size = 0x4, scoped, tag = 'scoped memory for tpu_custom_call.1']
    #allocation14 [shape = 'u8[8192]{0}', space=vmem, size = 0x2000, scoped, tag = 'input window, operand 4, single buffered']
    #allocation15 [shape = 'u8[8192]{0}', space=vmem, size = 0x2000, scoped, tag = 'output window, operand 0, single buffered']
    %17 = vsyncpa [#allocation10], 0
    %18 = vsyncpa [#allocation13], 0
    %19 = vsyncpa [#allocation11], 0
    // Predicated region
    $region2: #{tpu_custom_call.1} parent=1 // pred_check
      _
    $region3: #{tpu_custom_call.1} parent=1 // pred_check_branch
      %21 = sbr.rel (0) target = $region5
    $region4: #{tpu_custom_call.1} parent=1 // pred_region
      %s22 = sld [smem:[#allocation7]]
      %24 = vsyncadd [#allocation10], 0
      %s25 = smul.addr %s22, 4
      %s26 = scalar_lea.hbm %s2, %s25
      %s27 = sshll.u32 %s26, 4
      %s28 = int_to_ptr.hbm [resolvable:$true] %s27
      %s29 = sshll.u32 [#allocation9], 4
      %s30 = int_to_ptr.vmem [resolvable:$true] %s29
      %35 = dma.hbm_to_vmem [thread:$0]  %s28, 128, %s30, [#allocation10], 64, 64, 4
    $region5: #{tpu_custom_call.1} parent=1 // pred_fallthru
      _
    // Predicated region
    $region6: #{tpu_custom_call.1} parent=1 // pred_check
      _
    $region7: #{tpu_custom_call.1} parent=1 // pred_check_branch
      %37 = sbr.rel (0) target = $region9
    $region8: #{tpu_custom_call.1} parent=1 // pred_region
      %s38 = sld [smem:[#allocation8]]
      %40 = vsyncadd [#allocation13], 0
      %s41 = smul.addr %s38, 4
      %s42 = scalar_lea.hbm %s3, %s41
      %s43 = sshll.u32 %s42, 4
      %s44 = int_to_ptr.hbm [resolvable:$true] %s43
      %s45 = sshll.u32 [#allocation12], 4
      %s46 = int_to_ptr.vmem [resolvable:$true] %s45
      %51 = dma.hbm_to_vmem [thread:$0]  %s44, 128, %s46, [#allocation13], 64, 64, 4
    $region9: #{tpu_custom_call.1} parent=1 // pred_fallthru
      _
    // Predicated region
    $region10: #{tpu_custom_call.1} parent=1 // pred_check
      _
    $region11: #{tpu_custom_call.1} parent=1 // pred_check_branch
      %53 = sbr.rel (0) target = $region13
    $region12: #{tpu_custom_call.1} parent=1 // pred_region
      %55 = vsyncadd [#allocation13], 0
      %s56 = sshll.u32 %s4, 4
      %s57 = int_to_ptr.hbm [resolvable:$true] %s56
      %s58 = sshll.u32 [#allocation14], 4
      %s59 = int_to_ptr.vmem [resolvable:$true] %s58
      %64 = dma.hbm_to_vmem [thread:$0]  %s57, 256, %s59, [#allocation13], 64, 64, 4
    $region13: #{tpu_custom_call.1} parent=1 // pred_fallthru
      _
    // Predicated region
    $region14: #{tpu_custom_call.1} parent=1 // pred_check
      _
    $region15: #{tpu_custom_call.1} parent=1 // pred_check_branch
      %66 = sbr.rel (0) target = $region17
    $region16: #{tpu_custom_call.1} parent=1 // pred_region
      _
    $region17: #{tpu_custom_call.1} parent=1 // pred_fallthru
      _
    // Predicated region
    $region18: #{tpu_custom_call.1} parent=1 // pred_check
      _
    $region19: #{tpu_custom_call.1} parent=1 // pred_check_branch
      %68 = sbr.rel (0) target = $region21
    $region20: #{tpu_custom_call.1} parent=1 // pred_region
      _
    $region21: #{tpu_custom_call.1} parent=1 // pred_fallthru
      _
    // Predicated region
    $region22: #{tpu_custom_call.1} parent=1 // pred_check
      _
    $region23: #{tpu_custom_call.1} parent=1 // pred_check_branch
      %70 = sbr.rel (0) target = $region25
    $region24: #{tpu_custom_call.1} parent=1 // pred_region
      _
    $region25: #{tpu_custom_call.1} parent=1 // pred_fallthru
      _
    // Predicated region
    $region26: #{tpu_custom_call.1} parent=1 // pred_check
      _
    $region27: #{tpu_custom_call.1} parent=1 // pred_check_branch
      %72 = sbr.rel (0) target = $region29
    $region28: #{tpu_custom_call.1} parent=1 // pred_region
      _
    $region29: #{tpu_custom_call.1} parent=1 // pred_fallthru
      _
    // Predicated region
    $region30: #{tpu_custom_call.1} parent=1 // pred_check
      _
    $region31: #{tpu_custom_call.1} parent=1 // pred_check_branch
      %74 = sbr.rel (0) target = $region33
    $region32: #{tpu_custom_call.1} parent=1 // pred_region
      _
    $region33: #{tpu_custom_call.1} parent=1 // pred_fallthru
      _
    // Predicated region
    $region34: #{tpu_custom_call.1} parent=1 // pred_check
      _
    $region35: #{tpu_custom_call.1} parent=1 // pred_check_branch
      %76 = sbr.rel (0) target = $region37
    $region36: #{tpu_custom_call.1} parent=1 // pred_region
      %78 = dma.done [#allocation10], 128
    $region37: #{tpu_custom_call.1} parent=1 // pred_fallthru
      _
    // Predicated region
    $region38: #{tpu_custom_call.1} parent=1 // pred_check
      _
    $region39: #{tpu_custom_call.1} parent=1 // pred_check_branch
      %80 = sbr.rel (0) target = $region41
    $region40: #{tpu_custom_call.1} parent=1 // pred_region
      %82 = dma.done [#allocation13], 128
    $region41: #{tpu_custom_call.1} parent=1 // pred_fallthru
      _
    // Predicated region
    $region42: #{tpu_custom_call.1} parent=1 // pred_check
      _
    $region43: #{tpu_custom_call.1} parent=1 // pred_check_branch
      %84 = sbr.rel (0) target = $region45
    $region44: #{tpu_custom_call.1} parent=1 // pred_region
      %86 = dma.done [#allocation13], 256
    $region45: #{tpu_custom_call.1} parent=1 // pred_fallthru
      _
    %s87 = sld [smem:[#allocation7]]
    %s88 = sld [smem:[#allocation8]]
    %s89 = sld [smem:[#allocation7]]
    %s91 = sld [smem:[#allocation7]]
    %s92 = sld [smem:[#allocation8]]
    %p93 = scmp.eq.s32.totalorder %s92, 0
    // Predicated region
    $region46: #{tpu_custom_call.1} parent=1 // pred_check
      %p94 = pneg %p93
    $region47: #{tpu_custom_call.1} parent=1 // pred_check_branch
      %96 = sbr.rel (%p94) target = $region49
    $region48: #{tpu_custom_call.1} parent=1 // pred_region
      %vm97 = vcmask 7168
      %98 = vst.msk [vmem:[#allocation3] sm:$0xff] %vm97, -inf
      %99 = vst.msk [vmem:[#allocation3 + $0x8] sm:$0xff] %vm97, -inf
      %100 = vst.msk [vmem:[#allocation4] sm:$0xff] %vm97, 0.0
      %101 = vst.msk [vmem:[#allocation4 + $0x8] sm:$0xff] %vm97, 0.0
      %vm102 = vcmask 261120
      %103 = vst.msk [vmem:[#allocation5] sm:$0xff] %vm102, 0.0
      %104 = vst.msk [vmem:[#allocation5 + $0x8] sm:$0xff] %vm102, 0.0
      %v105 = vld [vmem:[#allocation9] sm:$0xf]
      %v106 = vld [vmem:[#allocation9 + $0x4] sm:$0xf]
      %v107 = vld [vmem:[#allocation14] sm:$0xf]
      %v108 = vld [vmem:[#allocation14 + $0x4] sm:$0xf]
      %v109 = vld [vmem:[#allocation14 + $0x8] sm:$0xf]
      %v110 = vld [vmem:[#allocation14 + $0xc] sm:$0xf]
      %v111 = vld [vmem:[%s5] sm:$0x1]
      %v113 = vperm.slane %v111, 0
      %v117 = vunpack.c.l.b16 %v105
      %v118 = vunpack.c.l.b16 %v106
      %v119 = vpack.c.b16 %v118, %v117
      %v124 = vunpack.c.l.b16 %v107
      %v125 = vunpack.c.l.b16 %v108
      %v126 = vunpack.c.l.b16 %v109
      %v127 = vunpack.c.l.b16 %v110
      %v128 = vpack.c.b16 %v125, %v124
      %v129 = vpack.c.b16 %v127, %v126
      %v133 = vsel %vm102, %v119, 0
      %135 = vmatpush.bf16.msra.mxu0 0
      %136 = vmatpush.bf16.msra.mxu0 0
      %137 = vmatpush.bf16.msra.mxu0 0
      %138 = vmatpush.bf16.msra.mxu0 0
      %139 = vmatpush.bf16.msra.mxu0 0
      %140 = vmatpush.bf16.msra.mxu0 0
      %141 = vmatpush.bf16.msra.mxu0 %v129
      %142 = vmatpush.bf16.msra.mxu0 %v128
      %143 = vmatmul.bf16.gmra.mxu0 %v133
      %v144 = vpop.f32.mrf.mxu0
      %v145 = vadd.f32 %v113, %v144
      %v146 = vpop.f32.mrf.mxu0
      %v147 = vadd.f32 %v113, %v146
      %148 = vdwg.mxu0
      %v149 = vsel %vm102, %v145, 0.0
      %150 = vadd.xlane.f32.xlu0 %v149
      %v151 = vpop.xlane.xlu0 %150
      %v152 = vsel %vm102, %v147, 0.0
      %153 = vadd.xlane.f32.xlu0 %v152
      %v154 = vpop.xlane.xlu0 %153
      %v155 = vrcp.pop 32.0
      %v156 = vmul.f32 32.0, %v155
      %v157 = vsub.f32 1.0, %v156
      %v158 = vmul.f32 %v155, %v157
      %v159 = vadd.f32 %v155, %v158
      %vm160 = vweird.f32 %v155
      %v161 = vsel %vm160, %v155, %v159
      %v162 = vmul.f32 %v151, %v161
      %v163 = vmul.f32 %v154, %v161
      %v164 = vsub.f32 %v145, %v162
      %v165 = vsub.f32 %v147, %v163
      %v166 = vmul.f32 %v164, %v164
      %v167 = vmul.f32 %v165, %v165
      %v168 = vsel %vm102, %v166, 0.0
      %169 = vadd.xlane.f32.xlu0 %v168
      %v170 = vpop.xlane.xlu0 %169
      %v171 = vsel %vm102, %v167, 0.0
      %172 = vadd.xlane.f32.xlu0 %v171
      %v173 = vpop.xlane.xlu0 %172
      %v174 = vmul.f32 %v170, %v161
      %v175 = vmul.f32 %v173, %v161
      %v176 = vadd.f32 %v174, 1e-05
      %v177 = vadd.f32 %v175, 1e-05
      %v178 = vrsqrt.pop %v176
      %v179 = vmul.f32 %v178, %v176
      %v180 = vmul.f32 %v179, %v178
      %v181 = vmul.f32 0.5, %v180
      %v182 = vsub.f32 1.5, %v181
      %v183 = vmul.f32 %v178, %v182
      %vm184 = vweird.f32 %v176
      %vm185 = vweird.f32 %v178
      %vm186 = vmor %vm184, %vm185
      %v187 = vsel %vm186, %v178, %v183
      %v188 = vrsqrt.pop %v177
      %v189 = vmul.f32 %v188, %v177
      %v190 = vmul.f32 %v189, %v188
      %v191 = vmul.f32 0.5, %v190
      %v192 = vsub.f32 1.5, %v191
      %v193 = vmul.f32 %v188, %v192
      %vm194 = vweird.f32 %v177
      %vm195 = vweird.f32 %v188
      %vm196 = vmor %vm194, %vm195
      %v197 = vsel %vm196, %v188, %v193
      %v198 = vmul.f32 %v164, %v187
      %v199 = vmul.f32 %v165, %v197
      %v200 = vld [vmem:[%s6] sm:$0x1]
      %v202 = vperm.slane %v200, 0
      %v204 = vmul.f32 %v198, %v202
      %v205 = vmul.f32 %v199, %v202
      %v206 = vld [vmem:[%s7] sm:$0x1]
      %v208 = vperm.slane %v206, 0
      %v210 = vadd.f32 %v204, %v208
      %v211 = vadd.f32 %v205, %v208
      %v212 = vpack.c.bf16 %v210, %v210
      %v213 = vpack.c.bf16 %v211, %v211
      %vm214 = vcmask 257024
      %215 = vst.msk [vmem:[#allocation2] sm:$0xf] %vm214, %v212
      %216 = vst.msk [vmem:[#allocation2 + $0x4] sm:$0xf] %vm214, %v213
    $region49: #{tpu_custom_call.1} parent=1 // pred_fallthru
      _
    %v217 = vld [vmem:[#allocation12] sm:$0xf]
    %v218 = vld [vmem:[#allocation12 + $0x4] sm:$0xf]
    %v219 = vld [vmem:[%s8] sm:$0x1]
    %v221 = vpack.i.b16 %v219, %v219
    %v223 = vperm.slane %v221, 0
    %v224 = vunpack.c.l.bf16 %v217
    %v225 = vunpack.c.l.bf16 %v218
    %v226 = vunpack.c.l.bf16 %v223
    %v227 = vmul.f32 %v224, %v226
    %v228 = vmul.f32 %v225, %v226
    %v229 = vpack.c.bf16 %v227, %v227
    %v230 = vpack.c.bf16 %v228, %v228
    %v231 = vld [vmem:[%s9] sm:$0x1]
    %v233 = vpack.i.b16 %v231, %v231
    %v235 = vperm.slane %v233, 0
    %v236 = vunpack.c.l.bf16 %v235
    %v237 = vmul.f32 %v224, %v236
    %v238 = vmul.f32 %v225, %v236
    %v239 = vpack.c.bf16 %v237, %v237
    %v240 = vpack.c.bf16 %v238, %v238
    %v241 = vld [vmem:[#allocation2] sm:$0xf]
    %v242 = vld [vmem:[#allocation2 + $0x4] sm:$0xf]
    %vm243 = vcmask 261120
    %v245 = vsel %vm243, %v241, 0
    %v248 = vsel %vm243, %v229, 0
    %250 = vmatpush.bf16.xpose.msra.mxu0 0
    %251 = vmatpush.bf16.xpose.msra.mxu0 0
    %252 = vmatpush.bf16.xpose.msra.mxu0 0
    %253 = vmatpush.bf16.xpose.msra.mxu0 0
    %254 = vmatpush.bf16.xpose.msra.mxu0 0
    %255 = vmatpush.bf16.xpose.msra.mxu0 0
    %256 = vmatpush.bf16.xpose.msra.mxu0 0
    %257 = vmatpush.bf16.xpose.msra.mxu0 %v248
    %258 = vmatmul.bf16.gmra.mxu0 %v245
    %v259 = vpop.f32.mrf.mxu0
    %v260 = vadd.f32 0.0, %v259
    %v261 = vpop.f32.mrf.mxu0
    %262 = vdwg.mxu0
    %v264 = vsel %vm243, %v242, 0
    %v267 = vsel %vm243, %v230, 0
    %269 = vmatpush.bf16.xpose.msra.mxu0 0
    %270 = vmatpush.bf16.xpose.msra.mxu0 0
    %271 = vmatpush.bf16.xpose.msra.mxu0 0
    %272 = vmatpush.bf16.xpose.msra.mxu0 0
    %273 = vmatpush.bf16.xpose.msra.mxu0 0
    %274 = vmatpush.bf16.xpose.msra.mxu0 0
    %275 = vmatpush.bf16.xpose.msra.mxu0 0
    %276 = vmatpush.bf16.xpose.msra.mxu0 %v267
    %277 = vmatmul.bf16.gmra.mxu0 %v264
    %v278 = vpop.f32.mrf.mxu0
    %v279 = vadd.f32 0.0, %v278
    %v280 = vpop.f32.mrf.mxu0
    %281 = vdwg.mxu0
    %p282 = scmp.lt.s32.totalorder %s92, %s91
    // Predicated region
    $region50: #{tpu_custom_call.1} parent=1 // pred_check
      %p283 = pneg %p282
    $region51: #{tpu_custom_call.1} parent=1 // pred_check_branch
      %285 = sbr.rel (%p283) target = $region53
    $region52: #{tpu_custom_call.1} parent=1 // pred_region
      %v286 = vld [vmem:[#allocation3] sm:$0xff]
      %v287 = vld [vmem:[#allocation3 + $0x8] sm:$0xff]
      %v288 = vld [vmem:[#allocation4] sm:$0xff]
      %v289 = vld [vmem:[#allocation4 + $0x8] sm:$0xff]
      %v290 = vld [vmem:[#allocation5] sm:$0xff]
      %v291 = vld [vmem:[#allocation5 + $0x8] sm:$0xff]
      %vm292 = vcmask 64512
      %v293 = vsel %vm292, %v260, -inf
      %294 = vmax.xlane.f32.xlu0 %v293
      %v295 = vpop.xlane.xlu0 %294
      %v296 = vsel %vm292, %v279, -inf
      %297 = vmax.xlane.f32.xlu0 %v296
      %v298 = vpop.xlane.xlu0 %297
      %v299 = vmax.f32 %v286, %v295
      %v300 = vmax.f32 %v287, %v298
      %v301 = vsub.f32 %v286, %v299
      %v302 = vsub.f32 %v287, %v300
      %v303 = vmul.f32 %v301, 1.442695
      %v304 = vpow.pop %v303
      %v305 = vmul.f32 %v302, 1.442695
      %v306 = vpow.pop %v305
      %308 = vset.pattern.permute.xlu0 0
      %309 = vperm.xlu0 %308, %v299
      %v310 = vpop.permute.xlu0 %309
      %313 = vset.pattern.permute.xlu0 0
      %314 = vperm.xlu0 %313, %v300
      %v315 = vpop.permute.xlu0 %314
      %v317 = vsub.f32 %v260, %v310
      %v318 = vsub.f32 %v279, %v315
      %v319 = vpack.c.bf16 %v317, %v317
      %v320 = vpack.c.bf16 %v318, %v318
      %v321 = vunpack.c.l.bf16 %v319
      %v322 = vunpack.c.l.bf16 %v320
      %v323 = vmul.f32 %v321, 1.442695
      %v324 = vpow.pop %v323
      %v325 = vmul.f32 %v322, 1.442695
      %v326 = vpow.pop %v325
      %v327 = vpack.c.bf16 %v324, %v324
      %v328 = vpack.c.bf16 %v326, %v326
      %v329 = vmul.f32 %v304, %v288
      %v330 = vmul.f32 %v306, %v289
      %v331 = vunpack.c.l.bf16 %v327
      %v332 = vunpack.c.l.bf16 %v328
      %v333 = vsel %vm292, %v331, 0.0
      %334 = vadd.xlane.f32.xlu0 %v333
      %v335 = vpop.xlane.xlu0 %334
      %v336 = vsel %vm292, %v332, 0.0
      %337 = vadd.xlane.f32.xlu0 %v336
      %v338 = vpop.xlane.xlu0 %337
      %v339 = vadd.f32 %v329, %v335
      %v340 = vadd.f32 %v330, %v338
      %342 = vset.pattern.permute.xlu0 0
      %343 = vperm.xlu0 %342, %v304
      %v344 = vpop.permute.xlu0 %343
      %347 = vset.pattern.permute.xlu0 0
      %348 = vperm.xlu0 %347, %v306
      %v349 = vpop.permute.xlu0 %348
      %v351 = vmul.f32 %v344, %v290
      %v352 = vmul.f32 %v349, %v291
      %v354 = vsel %vm292, %v327, 0
      %vm356 = vcmask 1043456
      %v358 = vsel %vm356, %v239, 0
      %360 = vmatpush.bf16.msra.mxu0 0
      %361 = vmatpush.bf16.msra.mxu0 0
      %362 = vmatpush.bf16.msra.mxu0 0
      %363 = vmatpush.bf16.msra.mxu0 0
      %364 = vmatpush.bf16.msra.mxu0 0
      %365 = vmatpush.bf16.msra.mxu0 0
      %366 = vmatpush.bf16.msra.mxu0 0
      %367 = vmatpush.bf16.msra.mxu0 %v358
      %368 = vmatmul.bf16.gmra.mxu0 %v354
      %v369 = vpop.f32.mrf.mxu0
      %v370 = vadd.f32 0.0, %v369
      %v371 = vpop.f32.mrf.mxu0
      %372 = vdwg.mxu0
      %v374 = vsel %vm292, %v328, 0
      %v377 = vsel %vm356, %v240, 0
      %379 = vmatpush.bf16.msra.mxu0 0
      %380 = vmatpush.bf16.msra.mxu0 0
      %381 = vmatpush.bf16.msra.mxu0 0
      %382 = vmatpush.bf16.msra.mxu0 0
      %383 = vmatpush.bf16.msra.mxu0 0
      %384 = vmatpush.bf16.msra.mxu0 0
      %385 = vmatpush.bf16.msra.mxu0 0
      %386 = vmatpush.bf16.msra.mxu0 %v377
      %387 = vmatmul.bf16.gmra.mxu0 %v374
      %v388 = vpop.f32.mrf.mxu0
      %v389 = vadd.f32 0.0, %v388
      %v390 = vpop.f32.mrf.mxu0
      %391 = vdwg.mxu0
      %v392 = vadd.f32 %v351, %v370
      %v393 = vadd.f32 %v352, %v389
      %vm394 = vcmask 7168
      %395 = vst.msk [vmem:[#allocation3] sm:$0xff] %vm394, %v299
      %396 = vst.msk [vmem:[#allocation3 + $0x8] sm:$0xff] %vm394, %v300
      %397 = vst.msk [vmem:[#allocation4] sm:$0xff] %vm394, %v339
      %398 = vst.msk [vmem:[#allocation4 + $0x8] sm:$0xff] %vm394, %v340
      %399 = vst.msk [vmem:[#allocation5] sm:$0xff] %vm243, %v392
      %400 = vst.msk [vmem:[#allocation5 + $0x8] sm:$0xff] %vm243, %v393
    $region53: #{tpu_custom_call.1} parent=1 // pred_fallthru
      _
    %p401 = scmp.eq.s32.totalorder %s92, %s91
    // Predicated region
    $region54: #{tpu_custom_call.1} parent=1 // pred_check
      %p402 = pneg %p401
    $region55: #{tpu_custom_call.1} parent=1 // pred_check_branch
      %404 = sbr.rel (%p402) target = $region57
    $region56: #{tpu_custom_call.1} parent=1 // pred_region
      %v405 = vlaneseq
      %v406 = vshrl.u32 %v405, 7
      %v407 = vlaneseq
      %v408 = vand.u32 %v407, 127
      %vm409 = vcmp.le.s32.totalorder %v408, %v406
      %v410 = vsel %vm409, 1, 0
      %vm411 = vcmp.eq.s32.totalorder %v410, 1
      %v412 = vsel %vm411, %v260, -inf
      %v413 = vsel %vm411, %v279, -inf
      %v414 = vld [vmem:[#allocation3] sm:$0xff]
      %v415 = vld [vmem:[#allocation3 + $0x8] sm:$0xff]
      %v416 = vld [vmem:[#allocation4] sm:$0xff]
      %v417 = vld [vmem:[#allocation4 + $0x8] sm:$0xff]
      %v418 = vld [vmem:[#allocation5] sm:$0xff]
      %v419 = vld [vmem:[#allocation5 + $0x8] sm:$0xff]
      %vm420 = vcmask 64512
      %v421 = vsel %vm420, %v412, -inf
      %422 = vmax.xlane.f32.xlu0 %v421
      %v423 = vpop.xlane.xlu0 %422
      %v424 = vsel %vm420, %v413, -inf
      %425 = vmax.xlane.f32.xlu0 %v424
      %v426 = vpop.xlane.xlu0 %425
      %v427 = vmax.f32 %v414, %v423
      %v428 = vmax.f32 %v415, %v426
      %v429 = vsub.f32 %v414, %v427
      %v430 = vsub.f32 %v415, %v428
      %v431 = vmul.f32 %v429, 1.442695
      %v432 = vpow.pop %v431
      %v433 = vmul.f32 %v430, 1.442695
      %v434 = vpow.pop %v433
      %436 = vset.pattern.permute.xlu0 0
      %437 = vperm.xlu0 %436, %v427
      %v438 = vpop.permute.xlu0 %437
      %441 = vset.pattern.permute.xlu0 0
      %442 = vperm.xlu0 %441, %v428
      %v443 = vpop.permute.xlu0 %442
      %v445 = vsub.f32 %v412, %v438
      %v446 = vsub.f32 %v413, %v443
      %v447 = vpack.c.bf16 %v445, %v445
      %v448 = vpack.c.bf16 %v446, %v446
      %v449 = vunpack.c.l.bf16 %v447
      %v450 = vunpack.c.l.bf16 %v448
      %v451 = vmul.f32 %v449, 1.442695
      %v452 = vpow.pop %v451
      %v453 = vmul.f32 %v450, 1.442695
      %v454 = vpow.pop %v453
      %v455 = vpack.c.bf16 %v452, %v452
      %v456 = vpack.c.bf16 %v454, %v454
      %v457 = vmul.f32 %v432, %v416
      %v458 = vmul.f32 %v434, %v417
      %v459 = vunpack.c.l.bf16 %v455
      %v460 = vunpack.c.l.bf16 %v456
      %v461 = vsel %vm420, %v459, 0.0
      %462 = vadd.xlane.f32.xlu0 %v461
      %v463 = vpop.xlane.xlu0 %462
      %v464 = vsel %vm420, %v460, 0.0
      %465 = vadd.xlane.f32.xlu0 %v464
      %v466 = vpop.xlane.xlu0 %465
      %v467 = vadd.f32 %v457, %v463
      %v468 = vadd.f32 %v458, %v466
      %470 = vset.pattern.permute.xlu0 0
      %471 = vperm.xlu0 %470, %v432
      %v472 = vpop.permute.xlu0 %471
      %475 = vset.pattern.permute.xlu0 0
      %476 = vperm.xlu0 %475, %v434
      %v477 = vpop.permute.xlu0 %476
      %v479 = vmul.f32 %v472, %v418
      %v480 = vmul.f32 %v477, %v419
      %v482 = vsel %vm420, %v455, 0
      %vm484 = vcmask 1043456
      %v486 = vsel %vm484, %v239, 0
      %488 = vmatpush.bf16.msra.mxu0 0
      %489 = vmatpush.bf16.msra.mxu0 0
      %490 = vmatpush.bf16.msra.mxu0 0
      %491 = vmatpush.bf16.msra.mxu0 0
      %492 = vmatpush.bf16.msra.mxu0 0
      %493 = vmatpush.bf16.msra.mxu0 0
      %494 = vmatpush.bf16.msra.mxu0 0
      %495 = vmatpush.bf16.msra.mxu0 %v486
      %496 = vmatmul.bf16.gmra.mxu0 %v482
      %v497 = vpop.f32.mrf.mxu0
      %v498 = vadd.f32 0.0, %v497
      %v499 = vpop.f32.mrf.mxu0
      %500 = vdwg.mxu0
      %v502 = vsel %vm420, %v456, 0
      %v505 = vsel %vm484, %v240, 0
      %507 = vmatpush.bf16.msra.mxu0 0
      %508 = vmatpush.bf16.msra.mxu0 0
      %509 = vmatpush.bf16.msra.mxu0 0
      %510 = vmatpush.bf16.msra.mxu0 0
      %511 = vmatpush.bf16.msra.mxu0 0
      %512 = vmatpush.bf16.msra.mxu0 0
      %513 = vmatpush.bf16.msra.mxu0 0
      %514 = vmatpush.bf16.msra.mxu0 %v505
      %515 = vmatmul.bf16.gmra.mxu0 %v502
      %v516 = vpop.f32.mrf.mxu0
      %v517 = vadd.f32 0.0, %v516
      %v518 = vpop.f32.mrf.mxu0
      %519 = vdwg.mxu0
      %v520 = vadd.f32 %v479, %v498
      %v521 = vadd.f32 %v480, %v517
      %v522 = vrcp.pop %v467
      %v523 = vrcp.pop %v468
      %525 = vset.pattern.permute.xlu0 0
      %526 = vperm.xlu0 %525, %v522
      %v527 = vpop.permute.xlu0 %526
      %530 = vset.pattern.permute.xlu0 0
      %531 = vperm.xlu0 %530, %v523
      %v532 = vpop.permute.xlu0 %531
      %v534 = vmul.f32 %v520, %v527
      %v535 = vmul.f32 %v521, %v532
      %536 = vst.msk [vmem:[#allocation15] sm:$0xff] %vm243, %v534
      %537 = vst.msk [vmem:[#allocation15 + $0x8] sm:$0xff] %vm243, %v535
    $region57: #{tpu_custom_call.1} parent=1 // pred_fallthru
      _
    // Predicated region
    $region58: #{tpu_custom_call.1} parent=1 // pred_check
      _
    $region59: #{tpu_custom_call.1} parent=1 // pred_check_branch
      %539 = sbr.rel (0) target = $region61
    $region60: #{tpu_custom_call.1} parent=1 // pred_region
      %s540 = sld [smem:[#allocation7]]
      %542 = vsyncadd [#allocation11], 0
      %s543 = smul.addr %s540, 8
      %s544 = scalar_lea.hbm %s10, %s543
      %s545 = sshll.u32 [#allocation15], 4
      %s546 = int_to_ptr.vmem [resolvable:$true] %s545
      %s547 = sshll.u32 %s544, 4
      %s548 = int_to_ptr.hbm [resolvable:$true] %s547
      %553 = dma.vmem_to_hbm [thread:$0]  %s546, 256, %s548, [#allocation11], 128, 128, 8
    $region61: #{tpu_custom_call.1} parent=1 // pred_fallthru
      _
    // Predicated region
    $region62: #{tpu_custom_call.1} parent=1 // pred_check
      _
    $region63: #{tpu_custom_call.1} parent=1 // pred_check_branch
      %555 = sbr.rel (0) target = $region65
    $region64: #{tpu_custom_call.1} parent=1 // pred_region
      %557 = dma.done [#allocation11], 256
    $region65: #{tpu_custom_call.1} parent=1 // pred_fallthru
      _
    %558 = vsyncpa [#allocation10], 1
    %559 = vsyncpa [#allocation13], 1
    %560 = vsyncpa [#allocation11], 1

</llo_original>
